<compile_context>
chip_gen: v6e
topology: v6e:2x2x1
jax: 0.10.0
libtpu: 0.0.40
codegen_flags: <defaults>
</compile_context>

<pallas_src>
import functools

import jax
import jax.numpy as jnp
from jax.experimental import pallas as pl
from jax.experimental.pallas import tpu as pltpu


def _conv1d_kernel(x_ref, w_ref, b_ref, *rest, K, Nt, with_residual):
    """One flattened-N tile of Conv1d(stride=1) + bias + ReLU (+ residual).

    x_ref: (C_in, Nt + K - 1)  tile of the flattened zero-padded input (halo
                               of K-1 columns already present in the layout)
    w_ref: (K, C_out, C_in)    per-tap weights, w_ref[k][o, c] = weight[o, c, k]
    b_ref: (C_out, 1)          bias column (broadcast over the tile)
    r_ref: (C_out, Nt)         (only if with_residual) residual tile
    o_ref: (C_out, Nt)
    """
    o_ref = rest[-1]
    # K accumulating dots into one f32 accumulator: no concatenates, no
    # materialized im2col; only contiguous lane slices of the resident tile.
    acc = jnp.dot(w_ref[0], x_ref[:, 0:Nt], preferred_element_type=jnp.float32)
    for k in range(1, K):
        acc = acc + jnp.dot(w_ref[k], x_ref[:, k:k + Nt],
                            preferred_element_type=jnp.float32)
    y = jnp.maximum(acc + b_ref[...], 0.0)           # bias + ReLU epilogue (f32)
    if with_residual:
        y = y + rest[0][...]                         # fused residual (post-ReLU)
    o_ref[...] = y.astype(o_ref.dtype)


def _choose_tile(n_valid, c_in, c_out, K, *, budget_bytes=8 << 20, max_nt=2048):
    """Pick the flattened-N tile width (multiple of 128 when possible)."""
    if n_valid <= 128:
        return n_valid                      # one tiny tile; full-dim block is legal
    # Rough per-column f32 VMEM cost: double-buffered x window + output,
    # K slice operands + accumulator.
    per_col = 4 * (2 * c_in + 2 * c_out + (K + 1) * c_in + c_out)
    nt = budget_bytes // max(per_col, 1)
    nt = max(128, min(max_nt, (nt // 128) * 128))
    nt = min(nt, ((n_valid + 127) // 128) * 128)
    return nt


def conv1d_relu(x, weight, bias, *, stride=1, padding=0, residual=None,
                use_bf16=False):
    """Pallas Conv1d(stride=1) + bias + ReLU (+ optional fused residual add).

    x: (B, C_in, L)   weight: (C_out, C_in, K)   bias: (C_out,)
    residual: optional (B, C_out, L_out), added AFTER the ReLU (module order).
    """
    # TODO(synk): stride > 1 not implemented (module default stride=1).
    assert stride == 1, "kernel specialized for stride=1"
    B, C_in, L = x.shape
    C_out, C_in_w, K = weight.shape
    assert C_in == C_in_w
    L_out = L + 2 * padding - K + 1
    assert L_out >= 1

    Lp = L + 2 * padding             # per-batch padded width; Lp - L_out == K - 1
    n_valid = B * Lp                 # flattened batch-major padded length
    Nt = _choose_tile(n_valid, C_in, C_out, K)
    assert Nt >= K
    n_tiles = -(-n_valid // Nt)
    n_pad = n_tiles * Nt

    compute_dtype = jnp.bfloat16 if use_bf16 else x.dtype

    # ---- one wrapper-side layout pass (fused by XLA): zero halo + flatten ----
    xf = jnp.transpose(x, (1, 0, 2))                           # (C_in, B, L)
    xf = jnp.pad(xf, ((0, 0), (0, 0), (padding, padding)))     # (C_in, B, Lp)
    xf = xf.reshape(C_in, n_valid)
    xf = jnp.pad(xf, ((0, 0), (0, n_pad - n_valid + K - 1)))
    # Per-tile layout (n_tiles, C_in, Nt + K - 1): each tile carries its own
    # K-1 halo columns so BlockSpec blocks stay non-overlapping.
    main = xf[:, :n_pad].reshape(C_in, n_tiles, Nt)
    if K > 1:
        halo = jnp.pad(xf[:, Nt:], ((0, 0), (0, Nt - K + 1)))
        halo = halo.reshape(C_in, n_tiles, Nt)[:, :, :K - 1]
        x_tiles = jnp.concatenate([main, halo], axis=2)
    else:
        x_tiles = main
    x_tiles = jnp.transpose(x_tiles, (1, 0, 2)).astype(compute_dtype)

    w_taps = jnp.transpose(weight, (2, 0, 1)).astype(compute_dtype)  # (K,Co,Ci)
    b_col = bias.reshape(C_out, 1).astype(jnp.float32)

    in_arrays = [x_tiles, w_taps, b_col]
    in_specs = [
        pl.BlockSpec((pl.Squeezed(), C_in, Nt + K - 1), lambda i: (i, 0, 0)),
        pl.BlockSpec((K, C_out, C_in), lambda i: (0, 0, 0)),
        pl.BlockSpec((C_out, 1), lambda i: (0, 0)),
    ]

    with_residual = residual is not None
    if with_residual:
        assert residual.shape == (B, C_out, L_out), residual.shape
        rf = jnp.transpose(residual, (1, 0, 2))                # (C_out, B, L_out)
        rf = jnp.pad(rf, ((0, 0), (0, 0), (0, Lp - L_out)))    # (C_out, B, Lp)
        rf = rf.reshape(C_out, n_valid)
        rf = jnp.pad(rf, ((0, 0), (0, n_pad - n_valid)))
        r_tiles = jnp.transpose(rf.reshape(C_out, n_tiles, Nt), (1, 0, 2))
        in_arrays.append(r_tiles.astype(jnp.float32))
        in_specs.append(
            pl.BlockSpec((pl.Squeezed(), C_out, Nt), lambda i: (i, 0, 0)))

    kernel = functools.partial(_conv1d_kernel, K=K, Nt=Nt,
                               with_residual=with_residual)

    out_tiles = pl.pallas_call(
        kernel,
        out_shape=jax.ShapeDtypeStruct((n_tiles, C_out, Nt), x.dtype),
        grid_spec=pltpu.PrefetchScalarGridSpec(
            num_scalar_prefetch=0,
            grid=(n_tiles,),
            in_specs=in_specs,
            out_specs=pl.BlockSpec((pl.Squeezed(), C_out, Nt),
                                   lambda i: (i, 0, 0)),
        ),
        compiler_params=pltpu.CompilerParams(
            dimension_semantics=("parallel",),
            vmem_limit_bytes=32 * 1024 * 1024),
    )(*in_arrays)

    # Undo the layout: (n_tiles, C_out, Nt) -> (B, C_out, L_out).  The last
    # K-1 columns of each per-batch Lp-wide slab are over-computed garbage and
    # are dropped here (kept finite: they only mix real data with zeros).
    out = jnp.transpose(out_tiles, (1, 0, 2)).reshape(C_out, n_pad)
    out = out[:, :n_valid].reshape(C_out, B, Lp)[:, :, :L_out]
    return jnp.transpose(out, (1, 0, 2))


def conv_module_forward(x, weight, bias, *, stride=1, padding=0,
                        add_residual=False, residual=None, use_bf16=False):
    """Mirrors Conv.forward (with_act=True, with_bn=False, act_func='ReLU')."""
    if not add_residual:
        return conv1d_relu(x, weight, bias, stride=stride, padding=padding,
                           use_bf16=use_bf16)
    if residual is None:
        residual = x   # module default; requires C_out == C_in and L_out == L
    return conv1d_relu(x, weight, bias, stride=stride, padding=padding,
                       residual=residual, use_bf16=use_bf16)


def _reference(x, weight, bias, padding, residual=None):
    out = jax.lax.conv_general_dilated(
        x, weight, window_strides=(1,), padding=[(padding, padding)],
        dimension_numbers=("NCH", "OIH", "NCH"))
    out = jnp.maximum(out + bias.reshape(1, -1, 1), 0.0)
    if residual is not None:
        out = residual + out
    return out


if __name__ == "__main__":
    # Module config: Conv(in_channels=4, out_channels=8, kernel_size=3, padding=1)
    B, C_in, L = 2, 4, 16
    C_out, K, padding = 8, 3, 1

    key = jax.random.PRNGKey(0)
    kx, kw, kb, kr = jax.random.split(key, 4)

    x = jax.random.normal(kx, (B, C_in, L), dtype=jnp.float32)
    # PyTorch-style uniform init (bound = 1/sqrt(fan_in)).
    bound = 1.0 / (C_in * K) ** 0.5
    weight = jax.random.uniform(kw, (C_out, C_in, K), jnp.float32, -bound, bound)
    bias = jax.random.uniform(kb, (C_out,), jnp.float32, -bound, bound)

    # Default module path: conv + bias + ReLU.
    out = conv_module_forward(x, weight, bias, padding=padding)
    out = jax.block_until_ready(out)
    ref = _reference(x, weight, bias, padding)
    assert out.shape == (B, C_out, L), out.shape
    assert jnp.allclose(out, ref, atol=3e-5, rtol=3e-5), "mismatch vs reference"

    # add_residual=True path with the residual add fused into the kernel.
    res = jax.random.normal(kr, (B, C_out, L), dtype=jnp.float32)
    out_r = conv_module_forward(x, weight, bias, padding=padding,
                                add_residual=True, residual=res)
    out_r = jax.block_until_ready(out_r)
    ref_r = _reference(x, weight, bias, padding, residual=res)
    assert jnp.allclose(out_r, ref_r, atol=3e-5, rtol=3e-5), "residual mismatch"

    print("KERNEL_OK")
</pallas_src>

<mosaic_0001>
module attributes {stable_mosaic.version = 11 : i64} {
  func.func @_conv1d_kernel(%arg0: i32, %arg1: memref<1x4x38xf32, #tpu.memory_space<vmem>>, %arg2: memref<3x8x4xf32, #tpu.memory_space<vmem>>, %arg3: memref<8x1xf32, #tpu.memory_space<vmem>>, %arg4: memref<1x8x36xf32, #tpu.memory_space<vmem>>) attributes {dimension_semantics = [#tpu.dimension_semantics<parallel>], iteration_bounds = array<i64: 1>, scalar_prefetch = 0 : i64, scratch_operands = 0 : i64, tpu.core_type = #tpu.core_type<tc>, window_params = [{transform_indices = @transform_0, window_bounds = array<i64: 1, 4, 38>}, {pipeline_mode = #tpu.pipeline_mode<synchronous>, transform_indices = @transform_1, window_bounds = array<i64: 3, 8, 4>}, {pipeline_mode = #tpu.pipeline_mode<synchronous>, transform_indices = @transform_2, window_bounds = array<i64: 8, 1>}, {transform_indices = @transform_3, window_bounds = array<i64: 1, 8, 36>}]} {
    %c0 = arith.constant 0 : index
    %c0_0 = arith.constant 0 : index
    %c0_1 = arith.constant 0 : index
    %0 = vector.load %arg2[%c0, %c0_0, %c0_1] : memref<3x8x4xf32, #tpu.memory_space<vmem>>, vector<1x8x4xf32>
    %1 = vector.shape_cast %0 : vector<1x8x4xf32> to vector<8x4xf32>
    %c0_2 = arith.constant 0 : index
    %c0_3 = arith.constant 0 : index
    %c0_4 = arith.constant 0 : index
    %2 = vector.load %arg1[%c0_2, %c0_3, %c0_4] : memref<1x4x38xf32, #tpu.memory_space<vmem>>, vector<1x4x36xf32>
    %3 = vector.shape_cast %2 : vector<1x4x36xf32> to vector<4x36xf32>
    %cst = arith.constant dense<0.000000e+00> : vector<8x36xf32>
    %4 = tpu.matmul %1, %3, %cst {dimension_numbers = #tpu.dot_dimension_numbers<[1], [0], [0], [1], [0, 0, 1, 1], [], []>} : vector<8x4xf32>, vector<4x36xf32>, vector<8x36xf32> -> vector<8x36xf32>
    %c1 = arith.constant 1 : index
    %c0_5 = arith.constant 0 : index
    %c0_6 = arith.constant 0 : index
    %5 = vector.load %arg2[%c1, %c0_5, %c0_6] : memref<3x8x4xf32, #tpu.memory_space<vmem>>, vector<1x8x4xf32>
    %6 = vector.shape_cast %5 : vector<1x8x4xf32> to vector<8x4xf32>
    %c0_7 = arith.constant 0 : index
    %c0_8 = arith.constant 0 : index
    %c1_9 = arith.constant 1 : index
    %7 = vector.load %arg1[%c0_7, %c0_8, %c1_9] : memref<1x4x38xf32, #tpu.memory_space<vmem>>, vector<1x4x36xf32>
    %8 = vector.shape_cast %7 : vector<1x4x36xf32> to vector<4x36xf32>
    %cst_10 = arith.constant dense<0.000000e+00> : vector<8x36xf32>
    %9 = tpu.matmul %6, %8, %cst_10 {dimension_numbers = #tpu.dot_dimension_numbers<[1], [0], [0], [1], [0, 0, 1, 1], [], []>} : vector<8x4xf32>, vector<4x36xf32>, vector<8x36xf32> -> vector<8x36xf32>
    %10 = arith.addf %4, %9 : vector<8x36xf32>
    %c2 = arith.constant 2 : index
    %c0_11 = arith.constant 0 : index
    %c0_12 = arith.constant 0 : index
    %11 = vector.load %arg2[%c2, %c0_11, %c0_12] : memref<3x8x4xf32, #tpu.memory_space<vmem>>, vector<1x8x4xf32>
    %12 = vector.shape_cast %11 : vector<1x8x4xf32> to vector<8x4xf32>
    %c0_13 = arith.constant 0 : index
    %c0_14 = arith.constant 0 : index
    %c2_15 = arith.constant 2 : index
    %13 = vector.load %arg1[%c0_13, %c0_14, %c2_15] : memref<1x4x38xf32, #tpu.memory_space<vmem>>, vector<1x4x36xf32>
    %14 = vector.shape_cast %13 : vector<1x4x36xf32> to vector<4x36xf32>
    %cst_16 = arith.constant dense<0.000000e+00> : vector<8x36xf32>
    %15 = tpu.matmul %12, %14, %cst_16 {dimension_numbers = #tpu.dot_dimension_numbers<[1], [0], [0], [1], [0, 0, 1, 1], [], []>} : vector<8x4xf32>, vector<4x36xf32>, vector<8x36xf32> -> vector<8x36xf32>
    %16 = arith.addf %10, %15 : vector<8x36xf32>
    %c0_17 = arith.constant 0 : index
    %c0_18 = arith.constant 0 : index
    %17 = vector.load %arg3[%c0_17, %c0_18] : memref<8x1xf32, #tpu.memory_space<vmem>>, vector<8x1xf32>
    %18 = vector.broadcast %17 : vector<8x1xf32> to vector<8x36xf32>
    %19 = arith.addf %16, %18 : vector<8x36xf32>
    %cst_19 = arith.constant 0.000000e+00 : f32
    %20 = vector.broadcast %cst_19 : f32 to vector<8x36xf32>
    %21 = arith.maximumf %19, %20 : vector<8x36xf32>
    %c0_20 = arith.constant 0 : index
    %c0_21 = arith.constant 0 : index
    %c0_22 = arith.constant 0 : index
    %22 = vector.load %arg4[%c0_20, %c0_21, %c0_22] : memref<1x8x36xf32, #tpu.memory_space<vmem>>, vector<1x8x36xf32>
    %23 = vector.shape_cast %22 : vector<1x8x36xf32> to vector<8x36xf32>
    %24 = vector.shape_cast %21 : vector<8x36xf32> to vector<1x8x36xf32>
    tpu.vector_store %arg4[%c0_20, %c0_21, %c0_22], %24 {strides = array<i32>} : memref<1x8x36xf32, #tpu.memory_space<vmem>>, vector<1x8x36xf32>,
    return
  }
  func.func @transform_0(%arg0: i32) -> (i32, i32, i32) {
    %c0_i32 = arith.constant 0 : i32
    %c0_i32_0 = arith.constant 0 : i32
    %c0_i32_1 = arith.constant 0 : i32
    return %arg0, %c0_i32, %c0_i32_0 : i32, i32, i32
  }
  func.func @transform_1(%arg0: i32) -> (i32, i32, i32) {
    %c0_i32 = arith.constant 0 : i32
    %c0_i32_0 = arith.constant 0 : i32
    %c0_i32_1 = arith.constant 0 : i32
    %c0_i32_2 = arith.constant 0 : i32
    return %c0_i32, %c0_i32_0, %c0_i32_1 : i32, i32, i32
  }
  func.func @transform_2(%arg0: i32) -> (i32, i32) {
    %c0_i32 = arith.constant 0 : i32
    %c0_i32_0 = arith.constant 0 : i32
    %c0_i32_1 = arith.constant 0 : i32
    return %c0_i32, %c0_i32_0 : i32, i32
  }
  func.func @transform_3(%arg0: i32) -> (i32, i32, i32) {
    %c0_i32 = arith.constant 0 : i32
    %c0_i32_0 = arith.constant 0 : i32
    %c0_i32_1 = arith.constant 0 : i32
    return %arg0, %c0_i32, %c0_i32_0 : i32, i32, i32
  }
}

</mosaic_0001>

<llo_original>
// kernel: tpu_custom_call.1
$region0: #{tpu_custom_call.1}
  #allocation0 [shape = 'u32[]', space=smem, size = 0x4, offset = 0x4, fixed_abs, tag = 'smem constant byte address 0x4 - core index']
  #allocation1 [shape = 'u32[144,128]{1,0:T(1,128)}', space=vmem, size = 0x12000, scoped, tag = 'internal scratch']
  %s0 = inlined_call_operand.vmem [shape: f32[1,4,38], index: 0, kind: input, shape index: {}]
  %s1 = inlined_call_operand.vmem [shape: f32[3,8,4], index: 1, kind: input, shape index: {}]
  %s2 = inlined_call_operand.vmem [shape: f32[8,1], index: 2, kind: input, shape index: {}]
  %s3 = inlined_call_operand.hbm [shape: f32[1,8,36], index: 3, kind: output, shape index: {}]
  %s4 = sld [smem:[#allocation0]]
  $region22: #{tpu_custom_call.1} parent=0
    _
  %s6 = ssub.s32 1, %s4
  %s7 = scalar_select 0, %s6, %s4
  $region1: #{tpu_custom_call.1} parent=0
    #allocation2 [shape = 'u8[4096]{0}', space=vmem, size = 0x1000, scoped, tag = 'output window, operand 0, single buffered']
    #allocation3 [shape = 's32[1]{0}', space=sflag, size = 0x4, scoped, tag = 'scoped memory for tpu_custom_call.1']
    %8 = vsyncpa [#allocation3], 0
    // Predicated region
    $region2: #{tpu_custom_call.1} parent=1 // pred_check
      _
    $region3: #{tpu_custom_call.1} parent=1 // pred_check_branch
      %10 = sbr.rel (0) target = $region5
    $region4: #{tpu_custom_call.1} parent=1 // pred_region
      _
    $region5: #{tpu_custom_call.1} parent=1 // pred_fallthru
      _
    // Predicated region
    $region6: #{tpu_custom_call.1} parent=1 // pred_check
      _
    $region7: #{tpu_custom_call.1} parent=1 // pred_check_branch
      %12 = sbr.rel (0) target = $region9
    $region8: #{tpu_custom_call.1} parent=1 // pred_region
      _
    $region9: #{tpu_custom_call.1} parent=1 // pred_fallthru
      _
    // Predicated region
    $region10: #{tpu_custom_call.1} parent=1 // pred_check
      _
    $region11: #{tpu_custom_call.1} parent=1 // pred_check_branch
      %14 = sbr.rel (0) target = $region13
    $region12: #{tpu_custom_call.1} parent=1 // pred_region
      _
    $region13: #{tpu_custom_call.1} parent=1 // pred_fallthru
      _
    %v15 = vld [vmem:[%s1] sm:$0xff]
    %v16 = vld [vmem:[%s0] sm:$0xf]
    %s17 = scalar_lea.vmem %s1, 8
    %v18 = vld [vmem:[%s17] sm:$0xff]
    %20 = vrot.lane.b32.xlu0 %v16, 127
    %v21 = vpop.permute.xlu0 %20
    %vm22 = vcmask 31744
    %v24 = vsel %vm22, %v18, 0
    %vm26 = vcmask 1043456
    %v27 = vsel %vm26, %v21, 0
    %29 = vmatprep.subr.mxu0 0.0
    %30 = vmatpush1.msra.mxu0 0.0
    %31 = vmatprep.subr.mxu0 0.0
    %32 = vmatpush1.msra.mxu0 0.0
    %33 = vmatprep.subr.mxu0 0.0
    %34 = vmatpush1.msra.mxu0 0.0
    %35 = vmatprep.subr.mxu0 0.0
    %36 = vmatpush1.msra.mxu0 0.0
    %37 = vmatprep.subr.mxu0 0.0
    %38 = vmatpush1.msra.mxu0 0.0
    %39 = vmatprep.subr.mxu0 0.0
    %40 = vmatpush1.msra.mxu0 0.0
    %41 = vmatprep.subr.mxu0 0.0
    %42 = vmatpush1.msra.mxu0 0.0
    %43 = vmatprep.subr.mxu0 0.0
    %44 = vmatpush1.msra.mxu0 0.0
    %45 = vmatprep.subr.mxu0 0.0
    %46 = vmatpush1.msra.mxu0 0.0
    %47 = vmatprep.subr.mxu0 0.0
    %48 = vmatpush1.msra.mxu0 0.0
    %49 = vmatprep.subr.mxu0 0.0
    %50 = vmatpush1.msra.mxu0 0.0
    %51 = vmatprep.subr.mxu0 0.0
    %52 = vmatpush1.msra.mxu0 0.0
    %53 = vmatprep.subr.mxu0 0.0
    %54 = vmatpush1.msra.mxu0 0.0
    %55 = vmatprep.subr.mxu0 0.0
    %56 = vmatpush1.msra.mxu0 0.0
    %57 = vmatprep.subr.mxu0 0.0
    %58 = vmatpush1.msra.mxu0 0.0
    %59 = vmatprep.subr.mxu0 0.0
    %60 = vmatpush1.msra.mxu0 %v27
    %61 = vmatprep.subr.mxu0 0.0
    %62 = vmatpush2.msra.mxu0 0.0
    %63 = vmatprep.subr.mxu0 0.0
    %64 = vmatpush2.msra.mxu0 0.0
    %65 = vmatprep.subr.mxu0 0.0
    %66 = vmatpush2.msra.mxu0 0.0
    %67 = vmatprep.subr.mxu0 0.0
    %68 = vmatpush2.msra.mxu0 0.0
    %69 = vmatprep.subr.mxu0 0.0
    %70 = vmatpush2.msra.mxu0 0.0
    %71 = vmatprep.subr.mxu0 0.0
    %72 = vmatpush2.msra.mxu0 0.0
    %73 = vmatprep.subr.mxu0 0.0
    %74 = vmatpush2.msra.mxu0 0.0
    %75 = vmatprep.subr.mxu0 0.0
    %76 = vmatpush2.msra.mxu0 0.0
    %77 = vmatprep.subr.mxu0 0.0
    %78 = vmatpush2.msra.mxu0 0.0
    %79 = vmatprep.subr.mxu0 0.0
    %80 = vmatpush2.msra.mxu0 0.0
    %81 = vmatprep.subr.mxu0 0.0
    %82 = vmatpush2.msra.mxu0 0.0
    %83 = vmatprep.subr.mxu0 0.0
    %84 = vmatpush2.msra.mxu0 0.0
    %85 = vmatprep.subr.mxu0 0.0
    %86 = vmatpush2.msra.mxu0 0.0
    %87 = vmatprep.subr.mxu0 0.0
    %88 = vmatpush2.msra.mxu0 0.0
    %89 = vmatprep.subr.mxu0 0.0
    %90 = vmatpush2.msra.mxu0 0.0
    %91 = vmatprep.subr.mxu0 0.0
    %92 = vmatpush2.msra.mxu0 0.0
    %93 = vmatprep.mubr.f32.mxu0 0.0
    %94 = vmatmul.mubr.f32.gmra.mxu0 %v24
    %v95 = vpop.f32.mrf.mxu0
    %v96 = vadd.f32 0.0, %v95
    %v97 = vpop.f32.mrf.mxu0
    %98 = vdwg.mxu0
    %v100 = vsel %vm22, %v15, 0
    %v102 = vsel %vm26, %v16, 0
    %104 = vmatprep.subr.mxu0 0.0
    %105 = vmatpush1.msra.mxu0 0.0
    %106 = vmatprep.subr.mxu0 0.0
    %107 = vmatpush1.msra.mxu0 0.0
    %108 = vmatprep.subr.mxu0 0.0
    %109 = vmatpush1.msra.mxu0 0.0
    %110 = vmatprep.subr.mxu0 0.0
    %111 = vmatpush1.msra.mxu0 0.0
    %112 = vmatprep.subr.mxu0 0.0
    %113 = vmatpush1.msra.mxu0 0.0
    %114 = vmatprep.subr.mxu0 0.0
    %115 = vmatpush1.msra.mxu0 0.0
    %116 = vmatprep.subr.mxu0 0.0
    %117 = vmatpush1.msra.mxu0 0.0
    %118 = vmatprep.subr.mxu0 0.0
    %119 = vmatpush1.msra.mxu0 0.0
    %120 = vmatprep.subr.mxu0 0.0
    %121 = vmatpush1.msra.mxu0 0.0
    %122 = vmatprep.subr.mxu0 0.0
    %123 = vmatpush1.msra.mxu0 0.0
    %124 = vmatprep.subr.mxu0 0.0
    %125 = vmatpush1.msra.mxu0 0.0
    %126 = vmatprep.subr.mxu0 0.0
    %127 = vmatpush1.msra.mxu0 0.0
    %128 = vmatprep.subr.mxu0 0.0
    %129 = vmatpush1.msra.mxu0 0.0
    %130 = vmatprep.subr.mxu0 0.0
    %131 = vmatpush1.msra.mxu0 0.0
    %132 = vmatprep.subr.mxu0 0.0
    %133 = vmatpush1.msra.mxu0 0.0
    %134 = vmatprep.subr.mxu0 0.0
    %135 = vmatpush1.msra.mxu0 %v102
    %136 = vmatprep.subr.mxu0 0.0
    %137 = vmatpush2.msra.mxu0 0.0
    %138 = vmatprep.subr.mxu0 0.0
    %139 = vmatpush2.msra.mxu0 0.0
    %140 = vmatprep.subr.mxu0 0.0
    %141 = vmatpush2.msra.mxu0 0.0
    %142 = vmatprep.subr.mxu0 0.0
    %143 = vmatpush2.msra.mxu0 0.0
    %144 = vmatprep.subr.mxu0 0.0
    %145 = vmatpush2.msra.mxu0 0.0
    %146 = vmatprep.subr.mxu0 0.0
    %147 = vmatpush2.msra.mxu0 0.0
    %148 = vmatprep.subr.mxu0 0.0
    %149 = vmatpush2.msra.mxu0 0.0
    %150 = vmatprep.subr.mxu0 0.0
    %151 = vmatpush2.msra.mxu0 0.0
    %152 = vmatprep.subr.mxu0 0.0
    %153 = vmatpush2.msra.mxu0 0.0
    %154 = vmatprep.subr.mxu0 0.0
    %155 = vmatpush2.msra.mxu0 0.0
    %156 = vmatprep.subr.mxu0 0.0
    %157 = vmatpush2.msra.mxu0 0.0
    %158 = vmatprep.subr.mxu0 0.0
    %159 = vmatpush2.msra.mxu0 0.0
    %160 = vmatprep.subr.mxu0 0.0
    %161 = vmatpush2.msra.mxu0 0.0
    %162 = vmatprep.subr.mxu0 0.0
    %163 = vmatpush2.msra.mxu0 0.0
    %164 = vmatprep.subr.mxu0 0.0
    %165 = vmatpush2.msra.mxu0 0.0
    %166 = vmatprep.subr.mxu0 0.0
    %167 = vmatpush2.msra.mxu0 0.0
    %168 = vmatprep.mubr.f32.mxu0 0.0
    %169 = vmatmul.mubr.f32.gmra.mxu0 %v100
    %v170 = vpop.f32.mrf.mxu0
    %v171 = vadd.f32 %v96, %v170
    %v172 = vpop.f32.mrf.mxu0
    %173 = vdwg.mxu0
    %s174 = scalar_lea.vmem %s1, 16
    %v175 = vld [vmem:[%s174] sm:$0xff]
    %176 = vrot.lane.b32.xlu0 %v16, 126
    %v177 = vpop.permute.xlu0 %176
    %v179 = vsel %vm22, %v175, 0
    %v181 = vsel %vm26, %v177, 0
    %183 = vmatprep.subr.mxu0 0.0
    %184 = vmatpush1.msra.mxu0 0.0
    %185 = vmatprep.subr.mxu0 0.0
    %186 = vmatpush1.msra.mxu0 0.0
    %187 = vmatprep.subr.mxu0 0.0
    %188 = vmatpush1.msra.mxu0 0.0
    %189 = vmatprep.subr.mxu0 0.0
    %190 = vmatpush1.msra.mxu0 0.0
    %191 = vmatprep.subr.mxu0 0.0
    %192 = vmatpush1.msra.mxu0 0.0
    %193 = vmatprep.subr.mxu0 0.0
    %194 = vmatpush1.msra.mxu0 0.0
    %195 = vmatprep.subr.mxu0 0.0
    %196 = vmatpush1.msra.mxu0 0.0
    %197 = vmatprep.subr.mxu0 0.0
    %198 = vmatpush1.msra.mxu0 0.0
    %199 = vmatprep.subr.mxu0 0.0
    %200 = vmatpush1.msra.mxu0 0.0
    %201 = vmatprep.subr.mxu0 0.0
    %202 = vmatpush1.msra.mxu0 0.0
    %203 = vmatprep.subr.mxu0 0.0
    %204 = vmatpush1.msra.mxu0 0.0
    %205 = vmatprep.subr.mxu0 0.0
    %206 = vmatpush1.msra.mxu0 0.0
    %207 = vmatprep.subr.mxu0 0.0
    %208 = vmatpush1.msra.mxu0 0.0
    %209 = vmatprep.subr.mxu0 0.0
    %210 = vmatpush1.msra.mxu0 0.0
    %211 = vmatprep.subr.mxu0 0.0
    %212 = vmatpush1.msra.mxu0 0.0
    %213 = vmatprep.subr.mxu0 0.0
    %214 = vmatpush1.msra.mxu0 %v181
    %215 = vmatprep.subr.mxu0 0.0
    %216 = vmatpush2.msra.mxu0 0.0
    %217 = vmatprep.subr.mxu0 0.0
    %218 = vmatpush2.msra.mxu0 0.0
    %219 = vmatprep.subr.mxu0 0.0
    %220 = vmatpush2.msra.mxu0 0.0
    %221 = vmatprep.subr.mxu0 0.0
    %222 = vmatpush2.msra.mxu0 0.0
    %223 = vmatprep.subr.mxu0 0.0
    %224 = vmatpush2.msra.mxu0 0.0
    %225 = vmatprep.subr.mxu0 0.0
    %226 = vmatpush2.msra.mxu0 0.0
    %227 = vmatprep.subr.mxu0 0.0
    %228 = vmatpush2.msra.mxu0 0.0
    %229 = vmatprep.subr.mxu0 0.0
    %230 = vmatpush2.msra.mxu0 0.0
    %231 = vmatprep.subr.mxu0 0.0
    %232 = vmatpush2.msra.mxu0 0.0
    %233 = vmatprep.subr.mxu0 0.0
    %234 = vmatpush2.msra.mxu0 0.0
    %235 = vmatprep.subr.mxu0 0.0
    %236 = vmatpush2.msra.mxu0 0.0
    %237 = vmatprep.subr.mxu0 0.0
    %238 = vmatpush2.msra.mxu0 0.0
    %239 = vmatprep.subr.mxu0 0.0
    %240 = vmatpush2.msra.mxu0 0.0
    %241 = vmatprep.subr.mxu0 0.0
    %242 = vmatpush2.msra.mxu0 0.0
    %243 = vmatprep.subr.mxu0 0.0
    %244 = vmatpush2.msra.mxu0 0.0
    %245 = vmatprep.subr.mxu0 0.0
    %246 = vmatpush2.msra.mxu0 0.0
    %247 = vmatprep.mubr.f32.mxu0 0.0
    %248 = vmatmul.mubr.f32.gmra.mxu0 %v179
    %v249 = vpop.f32.mrf.mxu0
    %v250 = vadd.f32 0.0, %v249
    %v251 = vpop.f32.mrf.mxu0
    %252 = vdwg.mxu0
    %v253 = vadd.f32 %v171, %v250
    %v254 = vld [vmem:[%s2] sm:$0xff]
    %256 = vset.pattern.permute.xlu0 0
    %257 = vperm.xlu0 %256, %v254
    %v258 = vpop.permute.xlu0 %257
    %v260 = vadd.f32 %v253, %v258
    %v261 = vmax.f32 %v260, 0.0
    %vm262 = vcmask 293888
    %263 = vst.msk [vmem:[#allocation2] sm:$0xff] %vm262, %v261
    // Predicated region
    $region14: #{tpu_custom_call.1} parent=1 // pred_check
      _
    $region15: #{tpu_custom_call.1} parent=1 // pred_check_branch
      %265 = sbr.rel (0) target = $region17
    $region16: #{tpu_custom_call.1} parent=1 // pred_region
      %s267 = ssub.s32 128, 128
      %268 = vsyncadd [#allocation3], %s267
      %s270 = sshll.u32 [#allocation2], 4
      %s271 = int_to_ptr.vmem [resolvable:$true] %s270
      %273 = dma.vmem_to_hbm [thread:$0]  %s271, 128, %s3, [#allocation3]
    $region17: #{tpu_custom_call.1} parent=1 // pred_fallthru
      _
    // Predicated region
    $region18: #{tpu_custom_call.1} parent=1 // pred_check
      _
    $region19: #{tpu_custom_call.1} parent=1 // pred_check_branch
      %275 = sbr.rel (0) target = $region21
    $region20: #{tpu_custom_call.1} parent=1 // pred_region
      %276 = dma.done [#allocation3], 128
    $region21: #{tpu_custom_call.1} parent=1 // pred_fallthru
      _
    %277 = vsyncpa [#allocation3], 1

</llo_original>
